<compile_context>
chip_gen: v6e
topology: v6e:2x2x1
jax: 0.10.0
libtpu: 0.0.40
codegen_flags: <defaults>
</compile_context>

<pallas_src>
import math
import functools

import jax
import jax.numpy as jnp
from jax import lax
from jax.experimental import pallas as pl
from jax.experimental.pallas import tpu as pltpu


# ----------------------------------------------------------------------------
# Weight construction (compile-time Python constants)
# ----------------------------------------------------------------------------
def _as_pair(v, cast):
    if isinstance(v, (int, float)):
        return [cast(v), cast(v)]
    return [cast(e) for e in v]


def _gaussian_1d_consts(size, std):
    """Normalized 1-D Gaussian taps as Python floats (compile-time constants).

    The PyTorch module builds the 2-D kernel as an outer product of per-axis
    Gaussians and normalizes the 2-D sum; normalizing each 1-D factor is
    mathematically identical (sum of outer product == product of sums)."""
    mean = (size - 1) / 2.0
    vals = [math.exp(-(((i - mean) / std) ** 2) / 2.0) for i in range(size)]
    s = sum(vals)
    return tuple(v / s for v in vals)


def _gaussian_kernel_2d(kernel_size, sigma):
    """Replicates GaussianSmoothing.__init__ weight construction (dim=2).
    Used only for the pure-JAX reference check in __main__."""
    ks = _as_pair(kernel_size, int)
    sg = _as_pair(sigma, float)
    kern = jnp.ones((), dtype=jnp.float32)
    grids = jnp.meshgrid(
        *[jnp.arange(s, dtype=jnp.float32) for s in ks], indexing="ij"
    )
    for size, std, mgrid in zip(ks, sg, grids):
        mean = (size - 1) / 2.0
        kern = kern * (
            1.0 / (std * math.sqrt(2.0 * math.pi))
            * jnp.exp(-(((mgrid - mean) / std) ** 2) / 2.0)
        )
    return kern / jnp.sum(kern)


# ----------------------------------------------------------------------------
# Tiling helpers
# ----------------------------------------------------------------------------
def _round_up(v, m):
    return (v + m - 1) // m * m


def _pick_nc_block(NC, slice_bytes, budget_bytes):
    """Block size along the flattened N*C axis (leading dim -> no (8,128)
    alignment constraint).  Chosen as a divisor of NC so the grid covers NC
    exactly (no pad pass, no ragged tail), sized so one padded input tile is
    ~budget_bytes.  Prefers an even number of grid steps so v7x's two
    TensorCores get equal work."""
    divisors = [d for d in range(1, NC + 1) if NC % d == 0]
    b_cap = max(1, budget_bytes // max(slice_bytes, 1))
    feasible = [d for d in divisors if d <= b_cap] or [1]
    b = max(feasible)
    if NC // b >= 2:
        even = [d for d in feasible if (NC // d) % 2 == 0]
        if even and 2 * max(even) >= b:
            b = max(even)
    return b


def _pick_register_chunk(b, W):
    """In-kernel chunk along N*C so one (bc, sh, W) f32 strip stays within
    ~8 vregs per live array (3 live arrays << 64-vreg file -> no spills)."""
    lane_tiles = (W + 127) // 128
    cap = max(1, 8 // lane_tiles)
    bc = 1
    for d in range(1, b + 1):
        if b % d == 0 and d <= cap:
            bc = d
    return bc


def _maybe_loop(n, body, unroll_limit=8):
    """for i in range(n): body(i).  Statically unrolled for short loops (LLO
    scheduling visibility); lax.fori_loop otherwise (bounds code size and live
    ranges for long strip loops)."""
    if n <= unroll_limit:
        for i in range(n):
            body(i)
    else:
        def _b(i, carry):
            body(i)
            return carry
        lax.fori_loop(0, n, _b, 0)


# ----------------------------------------------------------------------------
# Kernel
# ----------------------------------------------------------------------------
def _gauss_smooth_kernel(x_ref, o_ref, *, Kh, Kw, Hout, Wout, gv, gh, bc, sh):
    # x_ref: VMEM (b, H, W)      -- NCHW kept: W on lanes, H on sublanes.
    # o_ref: VMEM (b, Hout, Wout)
    b = x_ref.shape[0]
    nb = b // bc                      # bc divides b by construction
    ns = Hout // sh                   # full strips of sh output rows
    tail = Hout - ns * sh             # short final strip (aligned start)

    def do_strip(c0, r0, rows):
        # Pass 1 (H): Kh sublane-shifted *loads* from the VMEM ref (vld slots,
        # no materialized shifted copies), per-strip upcast, f32 accumulate.
        acc = gv[0] * x_ref[pl.ds(c0, bc), pl.ds(r0, rows), :].astype(jnp.float32)
        for u in range(1, Kh):
            acc = acc + gv[u] * x_ref[
                pl.ds(c0, bc), pl.ds(r0 + u, rows), :
            ].astype(jnp.float32)
        # Pass 2 (W): Kw static lane shifts on the small register-resident strip.
        out = gh[0] * acc[:, :, 0:Wout]
        for v in range(1, Kw):
            out = out + gh[v] * acc[:, :, v:v + Wout]
        o_ref[pl.ds(c0, bc), pl.ds(r0, rows), :] = out.astype(o_ref.dtype)

    def chunk(ci):
        c0 = ci * bc
        _maybe_loop(ns, lambda si: do_strip(c0, si * sh, sh))
        if tail:
            do_strip(c0, ns * sh, tail)   # static, sublane-aligned start

    _maybe_loop(nb, chunk)


# ----------------------------------------------------------------------------
# Wrapper (forward of GaussianSmoothing, dim=2: depthwise VALID conv, NCHW)
# ----------------------------------------------------------------------------
def gaussian_smoothing(x, channels, kernel_size, sigma):
    N, C, H, W = x.shape
    assert C == channels
    Kh, Kw = _as_pair(kernel_size, int)
    sgh, sgw = _as_pair(sigma, float)
    assert 1 <= Kh <= H and 1 <= Kw <= W, "VALID conv needs H >= Kh and W >= Kw"
    Hout, Wout = H - Kh + 1, W - Kw + 1
    NC = N * C
    itemsize = jnp.dtype(x.dtype).itemsize

    # Compile-time constant separable taps (outer product == PyTorch 2-D kernel).
    gv = _gaussian_1d_consts(Kh, sgh)
    gh = _gaussian_1d_consts(Kw, sgw)

    # NCHW kept end to end: leading-dim collapse only, no transpose / pad.
    x3 = x.reshape(NC, H, W)

    # Padded VMEM footprint of one (H, W) / (Hout, Wout) slice (f32/bf16 aware).
    in_slice = _round_up(H, 8) * _round_up(W, 128) * itemsize
    out_slice = _round_up(Hout, 8) * _round_up(Wout, 128) * itemsize

    b = _pick_nc_block(NC, in_slice, budget_bytes=4 << 20)   # ~4 MiB input tiles
    bc = _pick_register_chunk(b, W)
    lane_tiles = (W + 127) // 128
    sh = min(Hout, 8 * max(1, 8 // (bc * lane_tiles)))       # strip height

    in_tile, out_tile = b * in_slice, b * out_slice
    vmem_limit = int(max(2 * (in_tile + out_tile) + (8 << 20), 24 << 20))

    flops = 2 * (Kh * Hout * W + Kw * Hout * Wout) * NC
    bytes_accessed = (H * W + Hout * Wout) * NC * itemsize

    out3 = pl.pallas_call(
        functools.partial(
            _gauss_smooth_kernel,
            Kh=Kh, Kw=Kw, Hout=Hout, Wout=Wout, gv=gv, gh=gh, bc=bc, sh=sh,
        ),
        out_shape=jax.ShapeDtypeStruct((NC, Hout, Wout), x.dtype),
        grid=(NC // b,),
        in_specs=[pl.BlockSpec((b, H, W), lambda i: (i, 0, 0))],
        out_specs=pl.BlockSpec((b, Hout, Wout), lambda i: (i, 0, 0)),
        compiler_params=pltpu.CompilerParams(
            dimension_semantics=("parallel",),
            vmem_limit_bytes=vmem_limit,
        ),
        cost_estimate=pl.CostEstimate(
            flops=flops, transcendentals=0, bytes_accessed=bytes_accessed
        ),
    )(x3)

    return out3.reshape(N, C, Hout, Wout)


if __name__ == "__main__":
    # Module config (deterministic, built in-script)
    channels = 4
    kernel_size = 3
    sigma = 1.0

    key = jax.random.PRNGKey(0)
    x = jax.random.normal(key, (2, channels, 16, 16), dtype=jnp.float32)

    smooth = jax.jit(functools.partial(
        gaussian_smoothing, channels=channels,
        kernel_size=kernel_size, sigma=sigma))
    out = jax.block_until_ready(smooth(x))

    # Pure-JAX reference (same semantics as F.conv2d(groups=channels), VALID pad)
    kern2d = _gaussian_kernel_2d(kernel_size, sigma)
    w = jnp.tile(kern2d[None, None], (channels, 1, 1, 1))   # (C, 1, K, K)
    ref = jax.lax.conv_general_dilated(
        x, w, window_strides=(1, 1), padding="VALID",
        dimension_numbers=("NCHW", "OIHW", "NCHW"),
        feature_group_count=channels,
    )

    assert out.shape == ref.shape == (2, channels, 14, 14)
    assert jnp.allclose(out, ref, atol=1e-5, rtol=1e-5)
    print("KERNEL_OK")
</pallas_src>

<mosaic_0001>
module attributes {stable_mosaic.version = 11 : i64} {
  func.func @_gauss_smooth_kernel(%arg0: i32, %arg1: memref<8x16x16xf32, #tpu.memory_space<vmem>>, %arg2: memref<8x14x14xf32, #tpu.memory_space<vmem>>) attributes {dimension_semantics = [#tpu.dimension_semantics<parallel>], iteration_bounds = array<i64: 1>, scalar_prefetch = 0 : i64, scratch_operands = 0 : i64, tpu.core_type = #tpu.core_type<tc>, window_params = [{transform_indices = @transform_0, window_bounds = array<i64: 8, 16, 16>}, {transform_indices = @transform_1, window_bounds = array<i64: 8, 14, 14>}]} {
    %c0 = arith.constant 0 : index
    %c0_0 = arith.constant 0 : index
    %c0_1 = arith.constant 0 : index
    %0 = vector.load %arg1[%c0, %c0_0, %c0_1] : memref<8x16x16xf32, #tpu.memory_space<vmem>>, vector<8x8x16xf32>
    %cst = arith.constant 0.274068624 : f32
    %1 = vector.broadcast %cst : f32 to vector<8x8x16xf32>
    %2 = arith.mulf %1, %0 : vector<8x8x16xf32>
    %c0_2 = arith.constant 0 : index
    %c1 = arith.constant 1 : index
    %c0_3 = arith.constant 0 : index
    %3 = vector.load %arg1[%c0_2, %c1, %c0_3] : memref<8x16x16xf32, #tpu.memory_space<vmem>>, vector<8x8x16xf32>
    %cst_4 = arith.constant 0.451862752 : f32
    %4 = vector.broadcast %cst_4 : f32 to vector<8x8x16xf32>
    %5 = arith.mulf %4, %3 : vector<8x8x16xf32>
    %6 = arith.addf %2, %5 : vector<8x8x16xf32>
    %c0_5 = arith.constant 0 : index
    %c2 = arith.constant 2 : index
    %c0_6 = arith.constant 0 : index
    %7 = vector.load %arg1[%c0_5, %c2, %c0_6] : memref<8x16x16xf32, #tpu.memory_space<vmem>>, vector<8x8x16xf32>
    %cst_7 = arith.constant 0.274068624 : f32
    %8 = vector.broadcast %cst_7 : f32 to vector<8x8x16xf32>
    %9 = arith.mulf %8, %7 : vector<8x8x16xf32>
    %10 = arith.addf %6, %9 : vector<8x8x16xf32>
    %11 = vector.extract_strided_slice %10 {offsets = [0, 0, 0], sizes = [8, 8, 14], strides = [1, 1, 1]} : vector<8x8x16xf32> to vector<8x8x14xf32>
    %cst_8 = arith.constant 0.274068624 : f32
    %12 = vector.broadcast %cst_8 : f32 to vector<8x8x14xf32>
    %13 = arith.mulf %12, %11 : vector<8x8x14xf32>
    %14 = vector.extract_strided_slice %10 {offsets = [0, 0, 1], sizes = [8, 8, 14], strides = [1, 1, 1]} : vector<8x8x16xf32> to vector<8x8x14xf32>
    %cst_9 = arith.constant 0.451862752 : f32
    %15 = vector.broadcast %cst_9 : f32 to vector<8x8x14xf32>
    %16 = arith.mulf %15, %14 : vector<8x8x14xf32>
    %17 = arith.addf %13, %16 : vector<8x8x14xf32>
    %18 = vector.extract_strided_slice %10 {offsets = [0, 0, 2], sizes = [8, 8, 14], strides = [1, 1, 1]} : vector<8x8x16xf32> to vector<8x8x14xf32>
    %cst_10 = arith.constant 0.274068624 : f32
    %19 = vector.broadcast %cst_10 : f32 to vector<8x8x14xf32>
    %20 = arith.mulf %19, %18 : vector<8x8x14xf32>
    %21 = arith.addf %17, %20 : vector<8x8x14xf32>
    %c0_11 = arith.constant 0 : index
    %c0_12 = arith.constant 0 : index
    %c0_13 = arith.constant 0 : index
    %22 = vector.load %arg2[%c0_11, %c0_12, %c0_13] : memref<8x14x14xf32, #tpu.memory_space<vmem>>, vector<8x8x14xf32>
    tpu.vector_store %arg2[%c0_11, %c0_12, %c0_13], %21 {strides = array<i32>} : memref<8x14x14xf32, #tpu.memory_space<vmem>>, vector<8x8x14xf32>,
    %c0_14 = arith.constant 0 : index
    %c8 = arith.constant 8 : index
    %c0_15 = arith.constant 0 : index
    %23 = vector.load %arg1[%c0_14, %c8, %c0_15] : memref<8x16x16xf32, #tpu.memory_space<vmem>>, vector<8x6x16xf32>
    %cst_16 = arith.constant 0.274068624 : f32
    %24 = vector.broadcast %cst_16 : f32 to vector<8x6x16xf32>
    %25 = arith.mulf %24, %23 : vector<8x6x16xf32>
    %c0_17 = arith.constant 0 : index
    %c9 = arith.constant 9 : index
    %c0_18 = arith.constant 0 : index
    %26 = vector.load %arg1[%c0_17, %c9, %c0_18] : memref<8x16x16xf32, #tpu.memory_space<vmem>>, vector<8x6x16xf32>
    %cst_19 = arith.constant 0.451862752 : f32
    %27 = vector.broadcast %cst_19 : f32 to vector<8x6x16xf32>
    %28 = arith.mulf %27, %26 : vector<8x6x16xf32>
    %29 = arith.addf %25, %28 : vector<8x6x16xf32>
    %c0_20 = arith.constant 0 : index
    %c10 = arith.constant 10 : index
    %c0_21 = arith.constant 0 : index
    %30 = vector.load %arg1[%c0_20, %c10, %c0_21] : memref<8x16x16xf32, #tpu.memory_space<vmem>>, vector<8x6x16xf32>
    %cst_22 = arith.constant 0.274068624 : f32
    %31 = vector.broadcast %cst_22 : f32 to vector<8x6x16xf32>
    %32 = arith.mulf %31, %30 : vector<8x6x16xf32>
    %33 = arith.addf %29, %32 : vector<8x6x16xf32>
    %34 = vector.extract_strided_slice %33 {offsets = [0, 0, 0], sizes = [8, 6, 14], strides = [1, 1, 1]} : vector<8x6x16xf32> to vector<8x6x14xf32>
    %cst_23 = arith.constant 0.274068624 : f32
    %35 = vector.broadcast %cst_23 : f32 to vector<8x6x14xf32>
    %36 = arith.mulf %35, %34 : vector<8x6x14xf32>
    %37 = vector.extract_strided_slice %33 {offsets = [0, 0, 1], sizes = [8, 6, 14], strides = [1, 1, 1]} : vector<8x6x16xf32> to vector<8x6x14xf32>
    %cst_24 = arith.constant 0.451862752 : f32
    %38 = vector.broadcast %cst_24 : f32 to vector<8x6x14xf32>
    %39 = arith.mulf %38, %37 : vector<8x6x14xf32>
    %40 = arith.addf %36, %39 : vector<8x6x14xf32>
    %41 = vector.extract_strided_slice %33 {offsets = [0, 0, 2], sizes = [8, 6, 14], strides = [1, 1, 1]} : vector<8x6x16xf32> to vector<8x6x14xf32>
    %cst_25 = arith.constant 0.274068624 : f32
    %42 = vector.broadcast %cst_25 : f32 to vector<8x6x14xf32>
    %43 = arith.mulf %42, %41 : vector<8x6x14xf32>
    %44 = arith.addf %40, %43 : vector<8x6x14xf32>
    %c0_26 = arith.constant 0 : index
    %c8_27 = arith.constant 8 : index
    %c0_28 = arith.constant 0 : index
    %45 = vector.load %arg2[%c0_26, %c8_27, %c0_28] : memref<8x14x14xf32, #tpu.memory_space<vmem>>, vector<8x6x14xf32>
    tpu.vector_store %arg2[%c0_26, %c8_27, %c0_28], %44 {strides = array<i32>} : memref<8x14x14xf32, #tpu.memory_space<vmem>>, vector<8x6x14xf32>,
    return
  }
  func.func @transform_0(%arg0: i32) -> (i32, i32, i32) {
    %c0_i32 = arith.constant 0 : i32
    %c0_i32_0 = arith.constant 0 : i32
    %c0_i32_1 = arith.constant 0 : i32
    return %arg0, %c0_i32, %c0_i32_0 : i32, i32, i32
  }
  func.func @transform_1(%arg0: i32) -> (i32, i32, i32) {
    %c0_i32 = arith.constant 0 : i32
    %c0_i32_0 = arith.constant 0 : i32
    %c0_i32_1 = arith.constant 0 : i32
    return %arg0, %c0_i32, %c0_i32_0 : i32, i32, i32
  }
}

</mosaic_0001>

<llo_original>
// kernel: gaussian_smoothing.1
$region0: #{gaussian_smoothing.1}
  #allocation0 [shape = 'u32[]', space=smem, size = 0x4, offset = 0x4, fixed_abs, tag = 'smem constant byte address 0x4 - core index']
  #allocation1 [shape = 'u32[144,128]{1,0:T(1,128)}', space=vmem, size = 0x12000, scoped, tag = 'internal scratch']
  %s0 = inlined_call_operand.hbm [shape: f32[8,16,16], index: 0, kind: input, shape index: {}]
  %s1 = inlined_call_operand.vmem [shape: f32[8,14,14], index: 1, kind: output, shape index: {}]
  %s2 = sld [smem:[#allocation0]]
  $region18: #{gaussian_smoothing.1} parent=0
    _
  %s4 = ssub.s32 1, %s2
  %s5 = scalar_select 0, %s4, %s2
  $region1: #{gaussian_smoothing.1} parent=0
    #allocation2 [shape = 'u8[65536]{0}', space=vmem, size = 0x10000, scoped, tag = 'input window, operand 0, single buffered']
    #allocation3 [shape = 's32[1]{0}', space=sflag, size = 0x4, scoped, tag = 'scoped memory for gaussian_smoothing.1']
    %6 = vsyncpa [#allocation3], 0
    // Predicated region
    $region2: #{gaussian_smoothing.1} parent=1 // pred_check
      _
    $region3: #{gaussian_smoothing.1} parent=1 // pred_check_branch
      %8 = sbr.rel (0) target = $region5
    $region4: #{gaussian_smoothing.1} parent=1 // pred_region
      %s10 = ssub.s32 2048, 2048
      %11 = vsyncadd [#allocation3], %s10
      %s12 = sshll.u32 [#allocation2], 4
      %s13 = int_to_ptr.vmem [resolvable:$true] %s12
      %18 = dma.hbm_to_vmem [thread:$0]  %s0, 2048, %s13, [#allocation3], 128, 128, 8
    $region5: #{gaussian_smoothing.1} parent=1 // pred_fallthru
      _
    // Predicated region
    $region6: #{gaussian_smoothing.1} parent=1 // pred_check
      _
    $region7: #{gaussian_smoothing.1} parent=1 // pred_check_branch
      %20 = sbr.rel (0) target = $region9
    $region8: #{gaussian_smoothing.1} parent=1 // pred_region
      %21 = dma.done [#allocation3], 2048
    $region9: #{gaussian_smoothing.1} parent=1 // pred_fallthru
      _
    %v22 = vld [vmem:[#allocation2] sm:$0xff]
    %v23 = vld [vmem:[#allocation2 + $0x10] sm:$0xff]
    %v24 = vld [vmem:[#allocation2 + $0x20] sm:$0xff]
    %v25 = vld [vmem:[#allocation2 + $0x30] sm:$0xff]
    %v26 = vld [vmem:[#allocation2 + $0x40] sm:$0xff]
    %v27 = vld [vmem:[#allocation2 + $0x50] sm:$0xff]
    %v28 = vld [vmem:[#allocation2 + $0x60] sm:$0xff]
    %v29 = vld [vmem:[#allocation2 + $0x70] sm:$0xff]
    %v30 = vmul.f32 %v22, 0.27406862
    %v31 = vmul.f32 %v23, 0.27406862
    %v32 = vmul.f32 %v24, 0.27406862
    %v33 = vmul.f32 %v25, 0.27406862
    %v34 = vmul.f32 %v26, 0.27406862
    %v35 = vmul.f32 %v27, 0.27406862
    %v36 = vmul.f32 %v28, 0.27406862
    %v37 = vmul.f32 %v29, 0.27406862
    %v38 = vld [vmem:[#allocation2 + $0x1] sm:$0xff]
    %v39 = vld [vmem:[#allocation2 + $0x11] sm:$0xff]
    %v40 = vld [vmem:[#allocation2 + $0x21] sm:$0xff]
    %v41 = vld [vmem:[#allocation2 + $0x31] sm:$0xff]
    %v42 = vld [vmem:[#allocation2 + $0x41] sm:$0xff]
    %v43 = vld [vmem:[#allocation2 + $0x51] sm:$0xff]
    %v44 = vld [vmem:[#allocation2 + $0x61] sm:$0xff]
    %v45 = vld [vmem:[#allocation2 + $0x71] sm:$0xff]
    %v46 = vmul.f32 %v38, 0.45186275
    %v47 = vmul.f32 %v39, 0.45186275
    %v48 = vmul.f32 %v40, 0.45186275
    %v49 = vmul.f32 %v41, 0.45186275
    %v50 = vmul.f32 %v42, 0.45186275
    %v51 = vmul.f32 %v43, 0.45186275
    %v52 = vmul.f32 %v44, 0.45186275
    %v53 = vmul.f32 %v45, 0.45186275
    %v54 = vadd.f32 %v30, %v46
    %v55 = vadd.f32 %v31, %v47
    %v56 = vadd.f32 %v32, %v48
    %v57 = vadd.f32 %v33, %v49
    %v58 = vadd.f32 %v34, %v50
    %v59 = vadd.f32 %v35, %v51
    %v60 = vadd.f32 %v36, %v52
    %v61 = vadd.f32 %v37, %v53
    %v62 = vld [vmem:[#allocation2 + $0x2] sm:$0xff]
    %v63 = vld [vmem:[#allocation2 + $0x12] sm:$0xff]
    %v64 = vld [vmem:[#allocation2 + $0x22] sm:$0xff]
    %v65 = vld [vmem:[#allocation2 + $0x32] sm:$0xff]
    %v66 = vld [vmem:[#allocation2 + $0x42] sm:$0xff]
    %v67 = vld [vmem:[#allocation2 + $0x52] sm:$0xff]
    %v68 = vld [vmem:[#allocation2 + $0x62] sm:$0xff]
    %v69 = vld [vmem:[#allocation2 + $0x72] sm:$0xff]
    %v70 = vmul.f32 %v62, 0.27406862
    %v71 = vmul.f32 %v63, 0.27406862
    %v72 = vmul.f32 %v64, 0.27406862
    %v73 = vmul.f32 %v65, 0.27406862
    %v74 = vmul.f32 %v66, 0.27406862
    %v75 = vmul.f32 %v67, 0.27406862
    %v76 = vmul.f32 %v68, 0.27406862
    %v77 = vmul.f32 %v69, 0.27406862
    %v78 = vadd.f32 %v54, %v70
    %v79 = vadd.f32 %v55, %v71
    %v80 = vadd.f32 %v56, %v72
    %v81 = vadd.f32 %v57, %v73
    %v82 = vadd.f32 %v58, %v74
    %v83 = vadd.f32 %v59, %v75
    %v84 = vadd.f32 %v60, %v76
    %v85 = vadd.f32 %v61, %v77
    %v86 = vmul.f32 %v78, 0.27406862
    %v87 = vmul.f32 %v79, 0.27406862
    %v88 = vmul.f32 %v80, 0.27406862
    %v89 = vmul.f32 %v81, 0.27406862
    %v90 = vmul.f32 %v82, 0.27406862
    %v91 = vmul.f32 %v83, 0.27406862
    %v92 = vmul.f32 %v84, 0.27406862
    %v93 = vmul.f32 %v85, 0.27406862
    %v94 = vmul.f32 %v78, 0.45186275
    %v95 = vmul.f32 %v79, 0.45186275
    %v96 = vmul.f32 %v80, 0.45186275
    %v97 = vmul.f32 %v81, 0.45186275
    %v98 = vmul.f32 %v82, 0.45186275
    %v99 = vmul.f32 %v83, 0.45186275
    %v100 = vmul.f32 %v84, 0.45186275
    %v101 = vmul.f32 %v85, 0.45186275
    %110 = vrot.lane.b32.xlu0 %v94, 127
    %v111 = vpop.permute.xlu0 %110
    %112 = vrot.lane.b32.xlu0 %v95, 127
    %v113 = vpop.permute.xlu0 %112
    %114 = vrot.lane.b32.xlu0 %v96, 127
    %v115 = vpop.permute.xlu0 %114
    %116 = vrot.lane.b32.xlu0 %v97, 127
    %v117 = vpop.permute.xlu0 %116
    %118 = vrot.lane.b32.xlu0 %v98, 127
    %v119 = vpop.permute.xlu0 %118
    %120 = vrot.lane.b32.xlu0 %v99, 127
    %v121 = vpop.permute.xlu0 %120
    %122 = vrot.lane.b32.xlu0 %v100, 127
    %v123 = vpop.permute.xlu0 %122
    %124 = vrot.lane.b32.xlu0 %v101, 127
    %v125 = vpop.permute.xlu0 %124
    %v134 = vadd.f32 %v86, %v111
    %v135 = vadd.f32 %v87, %v113
    %v136 = vadd.f32 %v88, %v115
    %v137 = vadd.f32 %v89, %v117
    %v138 = vadd.f32 %v90, %v119
    %v139 = vadd.f32 %v91, %v121
    %v140 = vadd.f32 %v92, %v123
    %v141 = vadd.f32 %v93, %v125
    %150 = vrot.lane.b32.xlu0 %v86, 126
    %v151 = vpop.permute.xlu0 %150
    %152 = vrot.lane.b32.xlu0 %v87, 126
    %v153 = vpop.permute.xlu0 %152
    %154 = vrot.lane.b32.xlu0 %v88, 126
    %v155 = vpop.permute.xlu0 %154
    %156 = vrot.lane.b32.xlu0 %v89, 126
    %v157 = vpop.permute.xlu0 %156
    %158 = vrot.lane.b32.xlu0 %v90, 126
    %v159 = vpop.permute.xlu0 %158
    %160 = vrot.lane.b32.xlu0 %v91, 126
    %v161 = vpop.permute.xlu0 %160
    %162 = vrot.lane.b32.xlu0 %v92, 126
    %v163 = vpop.permute.xlu0 %162
    %164 = vrot.lane.b32.xlu0 %v93, 126
    %v165 = vpop.permute.xlu0 %164
    %v174 = vadd.f32 %v134, %v151
    %v175 = vadd.f32 %v135, %v153
    %v176 = vadd.f32 %v136, %v155
    %v177 = vadd.f32 %v137, %v157
    %v178 = vadd.f32 %v138, %v159
    %v179 = vadd.f32 %v139, %v161
    %v180 = vadd.f32 %v140, %v163
    %v181 = vadd.f32 %v141, %v165
    %vm182 = vcmask 113664
    %183 = vst.msk [vmem:[%s1] sm:$0xff] %vm182, %v174
    %184 = vst.msk [vmem:[%s1 + $0x10] sm:$0xff] %vm182, %v175
    %185 = vst.msk [vmem:[%s1 + $0x20] sm:$0xff] %vm182, %v176
    %186 = vst.msk [vmem:[%s1 + $0x30] sm:$0xff] %vm182, %v177
    %187 = vst.msk [vmem:[%s1 + $0x40] sm:$0xff] %vm182, %v178
    %188 = vst.msk [vmem:[%s1 + $0x50] sm:$0xff] %vm182, %v179
    %189 = vst.msk [vmem:[%s1 + $0x60] sm:$0xff] %vm182, %v180
    %190 = vst.msk [vmem:[%s1 + $0x70] sm:$0xff] %vm182, %v181
    %v191 = vld [vmem:[#allocation2 + $0x8] sm:$0x3f]
    %v192 = vld [vmem:[#allocation2 + $0x18] sm:$0x3f]
    %v193 = vld [vmem:[#allocation2 + $0x28] sm:$0x3f]
    %v194 = vld [vmem:[#allocation2 + $0x38] sm:$0x3f]
    %v195 = vld [vmem:[#allocation2 + $0x48] sm:$0x3f]
    %v196 = vld [vmem:[#allocation2 + $0x58] sm:$0x3f]
    %v197 = vld [vmem:[#allocation2 + $0x68] sm:$0x3f]
    %v198 = vld [vmem:[#allocation2 + $0x78] sm:$0x3f]
    %v199 = vmul.f32 %v191, 0.27406862
    %v200 = vmul.f32 %v192, 0.27406862
    %v201 = vmul.f32 %v193, 0.27406862
    %v202 = vmul.f32 %v194, 0.27406862
    %v203 = vmul.f32 %v195, 0.27406862
    %v204 = vmul.f32 %v196, 0.27406862
    %v205 = vmul.f32 %v197, 0.27406862
    %v206 = vmul.f32 %v198, 0.27406862
    %v207 = vld [vmem:[#allocation2 + $0x9] sm:$0x3f]
    %v208 = vld [vmem:[#allocation2 + $0x19] sm:$0x3f]
    %v209 = vld [vmem:[#allocation2 + $0x29] sm:$0x3f]
    %v210 = vld [vmem:[#allocation2 + $0x39] sm:$0x3f]
    %v211 = vld [vmem:[#allocation2 + $0x49] sm:$0x3f]
    %v212 = vld [vmem:[#allocation2 + $0x59] sm:$0x3f]
    %v213 = vld [vmem:[#allocation2 + $0x69] sm:$0x3f]
    %v214 = vld [vmem:[#allocation2 + $0x79] sm:$0x3f]
    %v215 = vmul.f32 %v207, 0.45186275
    %v216 = vmul.f32 %v208, 0.45186275
    %v217 = vmul.f32 %v209, 0.45186275
    %v218 = vmul.f32 %v210, 0.45186275
    %v219 = vmul.f32 %v211, 0.45186275
    %v220 = vmul.f32 %v212, 0.45186275
    %v221 = vmul.f32 %v213, 0.45186275
    %v222 = vmul.f32 %v214, 0.45186275
    %v223 = vadd.f32 %v199, %v215
    %v224 = vadd.f32 %v200, %v216
    %v225 = vadd.f32 %v201, %v217
    %v226 = vadd.f32 %v202, %v218
    %v227 = vadd.f32 %v203, %v219
    %v228 = vadd.f32 %v204, %v220
    %v229 = vadd.f32 %v205, %v221
    %v230 = vadd.f32 %v206, %v222
    %v231 = vld [vmem:[#allocation2 + $0xa] sm:$0x3f]
    %v232 = vld [vmem:[#allocation2 + $0x1a] sm:$0x3f]
    %v233 = vld [vmem:[#allocation2 + $0x2a] sm:$0x3f]
    %v234 = vld [vmem:[#allocation2 + $0x3a] sm:$0x3f]
    %v235 = vld [vmem:[#allocation2 + $0x4a] sm:$0x3f]
    %v236 = vld [vmem:[#allocation2 + $0x5a] sm:$0x3f]
    %v237 = vld [vmem:[#allocation2 + $0x6a] sm:$0x3f]
    %v238 = vld [vmem:[#allocation2 + $0x7a] sm:$0x3f]
    %v239 = vmul.f32 %v231, 0.27406862
    %v240 = vmul.f32 %v232, 0.27406862
    %v241 = vmul.f32 %v233, 0.27406862
    %v242 = vmul.f32 %v234, 0.27406862
    %v243 = vmul.f32 %v235, 0.27406862
    %v244 = vmul.f32 %v236, 0.27406862
    %v245 = vmul.f32 %v237, 0.27406862
    %v246 = vmul.f32 %v238, 0.27406862
    %v247 = vadd.f32 %v223, %v239
    %v248 = vadd.f32 %v224, %v240
    %v249 = vadd.f32 %v225, %v241
    %v250 = vadd.f32 %v226, %v242
    %v251 = vadd.f32 %v227, %v243
    %v252 = vadd.f32 %v228, %v244
    %v253 = vadd.f32 %v229, %v245
    %v254 = vadd.f32 %v230, %v246
    %v255 = vmul.f32 %v247, 0.27406862
    %v256 = vmul.f32 %v248, 0.27406862
    %v257 = vmul.f32 %v249, 0.27406862
    %v258 = vmul.f32 %v250, 0.27406862
    %v259 = vmul.f32 %v251, 0.27406862
    %v260 = vmul.f32 %v252, 0.27406862
    %v261 = vmul.f32 %v253, 0.27406862
    %v262 = vmul.f32 %v254, 0.27406862
    %v263 = vmul.f32 %v247, 0.45186275
    %v264 = vmul.f32 %v248, 0.45186275
    %v265 = vmul.f32 %v249, 0.45186275
    %v266 = vmul.f32 %v250, 0.45186275
    %v267 = vmul.f32 %v251, 0.45186275
    %v268 = vmul.f32 %v252, 0.45186275
    %v269 = vmul.f32 %v253, 0.45186275
    %v270 = vmul.f32 %v254, 0.45186275
    %279 = vrot.lane.b32.xlu0 %v263, 127
    %v280 = vpop.permute.xlu0 %279
    %281 = vrot.lane.b32.xlu0 %v264, 127
    %v282 = vpop.permute.xlu0 %281
    %283 = vrot.lane.b32.xlu0 %v265, 127
    %v284 = vpop.permute.xlu0 %283
    %285 = vrot.lane.b32.xlu0 %v266, 127
    %v286 = vpop.permute.xlu0 %285
    %287 = vrot.lane.b32.xlu0 %v267, 127
    %v288 = vpop.permute.xlu0 %287
    %289 = vrot.lane.b32.xlu0 %v268, 127
    %v290 = vpop.permute.xlu0 %289
    %291 = vrot.lane.b32.xlu0 %v269, 127
    %v292 = vpop.permute.xlu0 %291
    %293 = vrot.lane.b32.xlu0 %v270, 127
    %v294 = vpop.permute.xlu0 %293
    %v303 = vadd.f32 %v255, %v280
    %v304 = vadd.f32 %v256, %v282
    %v305 = vadd.f32 %v257, %v284
    %v306 = vadd.f32 %v258, %v286
    %v307 = vadd.f32 %v259, %v288
    %v308 = vadd.f32 %v260, %v290
    %v309 = vadd.f32 %v261, %v292
    %v310 = vadd.f32 %v262, %v294
    %319 = vrot.lane.b32.xlu0 %v255, 126
    %v320 = vpop.permute.xlu0 %319
    %321 = vrot.lane.b32.xlu0 %v256, 126
    %v322 = vpop.permute.xlu0 %321
    %323 = vrot.lane.b32.xlu0 %v257, 126
    %v324 = vpop.permute.xlu0 %323
    %325 = vrot.lane.b32.xlu0 %v258, 126
    %v326 = vpop.permute.xlu0 %325
    %327 = vrot.lane.b32.xlu0 %v259, 126
    %v328 = vpop.permute.xlu0 %327
    %329 = vrot.lane.b32.xlu0 %v260, 126
    %v330 = vpop.permute.xlu0 %329
    %331 = vrot.lane.b32.xlu0 %v261, 126
    %v332 = vpop.permute.xlu0 %331
    %333 = vrot.lane.b32.xlu0 %v262, 126
    %v334 = vpop.permute.xlu0 %333
    %v343 = vadd.f32 %v303, %v320
    %v344 = vadd.f32 %v304, %v322
    %v345 = vadd.f32 %v305, %v324
    %v346 = vadd.f32 %v306, %v326
    %v347 = vadd.f32 %v307, %v328
    %v348 = vadd.f32 %v308, %v330
    %v349 = vadd.f32 %v309, %v332
    %v350 = vadd.f32 %v310, %v334
    %vm351 = vcmask 111616
    %352 = vst.msk [vmem:[%s1 + $0x8] sm:$0x3f] %vm351, %v343
    %353 = vst.msk [vmem:[%s1 + $0x18] sm:$0x3f] %vm351, %v344
    %354 = vst.msk [vmem:[%s1 + $0x28] sm:$0x3f] %vm351, %v345
    %355 = vst.msk [vmem:[%s1 + $0x38] sm:$0x3f] %vm351, %v346
    %356 = vst.msk [vmem:[%s1 + $0x48] sm:$0x3f] %vm351, %v347
    %357 = vst.msk [vmem:[%s1 + $0x58] sm:$0x3f] %vm351, %v348
    %358 = vst.msk [vmem:[%s1 + $0x68] sm:$0x3f] %vm351, %v349
    %359 = vst.msk [vmem:[%s1 + $0x78] sm:$0x3f] %vm351, %v350
    // Predicated region
    $region10: #{gaussian_smoothing.1} parent=1 // pred_check
      _
    $region11: #{gaussian_smoothing.1} parent=1 // pred_check_branch
      %361 = sbr.rel (0) target = $region13
    $region12: #{gaussian_smoothing.1} parent=1 // pred_region
      _
    $region13: #{gaussian_smoothing.1} parent=1 // pred_fallthru
      _
    // Predicated region
    $region14: #{gaussian_smoothing.1} parent=1 // pred_check
      _
    $region15: #{gaussian_smoothing.1} parent=1 // pred_check_branch
      %363 = sbr.rel (0) target = $region17
    $region16: #{gaussian_smoothing.1} parent=1 // pred_region
      _
    $region17: #{gaussian_smoothing.1} parent=1 // pred_fallthru
      _
    %364 = vsyncpa [#allocation3], 1

</llo_original>
